<compile_context>
chip_gen: v7x
topology: tpu7x:2x2x1
jax: 0.10.0
libtpu: 0.0.40
codegen_flags: <defaults>
</compile_context>

<pallas_src>
import math

import jax
import jax.numpy as jnp
from jax.experimental import pallas as pl
from jax.experimental.pallas import tpu as pltpu


def _flipout_kernel(x_ref, w_ref, nz_ref, b_ref, si_ref, so_ref, o_ref, pert_acc):
    """Grid = (N tiles [parallel], K tiles [reduction, last]).

    x_ref    : (B, tk)  f32   input K-slice
    w_ref    : (tk, tn) bf16  weight_mean tile, pre-transposed (K, N) layout
    nz_ref   : (tk, tn) bf16  noise_std tile = eps * exp(logvar/2) * W, (K, N)
    b_ref    : (1, tn)  f32   bias tile
    si_ref   : (B, tk)  f32   flipout input signs (+/-1)
    so_ref   : (B, tn)  f32   flipout output signs (+/-1)
    o_ref    : (B, tn)  f32   output tile, resident across the K axis
    pert_acc : (B, tn)  f32   VMEM scratch, flipout perturbation accumulator
    """
    k = pl.program_id(1)

    @pl.when(k == 0)
    def _init():
        # Fold the deterministic bias into the output-block init.
        o_ref[...] = jnp.broadcast_to(b_ref[...], o_ref.shape).astype(o_ref.dtype)
        pert_acc[...] = jnp.zeros_like(pert_acc)

    x = x_ref[...]
    # bf16 operands keep the MXU on its fast path; bf16 products are exact in
    # the f32 accumulator (preferred_element_type below).
    x_bf = x.astype(jnp.bfloat16)
    xs_bf = (x * si_ref[...]).astype(jnp.bfloat16)

    # Mean path accumulates straight into the resident output block.
    o_ref[...] += jnp.dot(x_bf, w_ref[...], preferred_element_type=jnp.float32)
    # Flipout perturbation path.
    pert_acc[...] += jnp.dot(xs_bf, nz_ref[...], preferred_element_type=jnp.float32)

    @pl.when(k == pl.num_programs(1) - 1)
    def _finalize():
        o_ref[...] += so_ref[...] * pert_acc[...]


def _vmem_limit_bytes(B, tn, tk):
    f32, bf16, dbl = 4, 2, 2                 # dbl = BlockSpec double buffering
    need = dbl * (B * tk * f32               # x
                  + 2 * tk * tn * bf16       # W + noise_std (bf16 streams)
                  + tn * f32                 # bias
                  + B * tk * f32             # sign_in
                  + 2 * B * tn * f32)        # sign_out + output
    need += B * tn * f32                     # perturbation accumulator scratch
    try:
        phys = pltpu.get_tpu_info().vmem_capacity_bytes
    except Exception:                        # interpret mode / no TPU visible
        phys = 128 << 20
    cap = (phys * 3) // 4                    # ~48 MiB on v7x, ~96 MiB on v5e/v6e
    # Never cap below the computed footprint (graceful rather than artificial OOM).
    return int(min(max(2 * need, 16 << 20), max(cap, 2 * need)))


def flipout_prepare_params(weight, weight_logvar, weight_multiplicative_variance=True):
    """Run once per *parameter update* (off the per-forward hot path).

    Returns:
      w_kn     : weight pre-transposed to (K, N) and cast bf16 (HBM-bound stream)
      sigma_kn : exp(logvar/2) [* W], (K, N) f32; noise_std = eps * sigma per forward
    """
    sigma = jnp.exp(0.5 * weight_logvar)
    if weight_multiplicative_variance:
        sigma = sigma * weight
    w_kn = weight.T.astype(jnp.bfloat16)
    sigma_kn = sigma.T.astype(jnp.float32)
    return w_kn, sigma_kn


def variational_flipout_linear(x, w_kn, sigma_kn, bias, key, *,
                               tile_n=512, tile_k=2048, return_noise=False):
    """x: (B, K) f32, w_kn/sigma_kn: (K, N) (from flipout_prepare_params), bias: (N,).

    key: jax PRNG key — fresh per forward (eps and the flipout signs).
    return_noise=True additionally returns (noise_kn, sign_in, sign_out) for
    verification; the production path returns only the output.
    """
    B, K = x.shape
    K2, N = w_kn.shape
    assert K2 == K and sigma_kn.shape == (K, N) and bias.shape == (N,)

    tn = min(tile_n, N)
    tk = min(tile_k, K)
    assert N % tn == 0 and K % tk == 0, "tile sizes must divide (out, in) features"
    grid = (N // tn, K // tk)

    # Per-forward stochastic draws (Gaussian eps + Rademacher flipout signs).
    k_eps, k_si, k_so = jax.random.split(key, 3)
    eps = jax.random.normal(k_eps, (K, N), dtype=jnp.float32)
    noise_kn = (eps * sigma_kn).astype(jnp.bfloat16)
    sign_in = jnp.where(jax.random.bernoulli(k_si, 0.5, (B, K)),
                        1.0, -1.0).astype(jnp.float32)
    sign_out = jnp.where(jax.random.bernoulli(k_so, 0.5, (B, N)),
                         1.0, -1.0).astype(jnp.float32)

    grid_spec = pltpu.PrefetchScalarGridSpec(
        num_scalar_prefetch=0,
        grid=grid,
        in_specs=[
            pl.BlockSpec((B, tk), lambda nb, kb: (0, kb)),    # x
            pl.BlockSpec((tk, tn), lambda nb, kb: (kb, nb)),  # W (K, N) bf16
            pl.BlockSpec((tk, tn), lambda nb, kb: (kb, nb)),  # noise_std (K, N) bf16
            pl.BlockSpec((1, tn), lambda nb, kb: (0, nb)),    # bias
            pl.BlockSpec((B, tk), lambda nb, kb: (0, kb)),    # sign_in
            pl.BlockSpec((B, tn), lambda nb, kb: (0, nb)),    # sign_out
        ],
        out_specs=pl.BlockSpec((B, tn), lambda nb, kb: (0, nb)),
        scratch_shapes=[pltpu.VMEM((B, tn), jnp.float32)],    # perturbation acc
    )

    out = pl.pallas_call(
        _flipout_kernel,
        out_shape=jax.ShapeDtypeStruct((B, N), jnp.float32),
        grid_spec=grid_spec,
        compiler_params=pltpu.CompilerParams(
            dimension_semantics=("parallel", "arbitrary"),
            vmem_limit_bytes=_vmem_limit_bytes(B, tn, tk)),
    )(x, w_kn, noise_kn, bias.reshape(1, N), sign_in, sign_out)

    if return_noise:
        return out, noise_kn, sign_in, sign_out
    return out


if __name__ == "__main__":
    key = jax.random.PRNGKey(0)
    k_x, k_w, k_b, k_fwd = jax.random.split(key, 4)

    B, in_features, out_features = 8, 384, 256   # small, but multi-tile in N and K

    x = jax.random.normal(k_x, (B, in_features), dtype=jnp.float32)
    weight = jax.random.normal(k_w, (out_features, in_features), dtype=jnp.float32) * 0.1
    bias = jax.random.normal(k_b, (out_features,), dtype=jnp.float32) * 0.1
    # nn.Parameter init in the module: log(1 / prod(weight.shape[1:])) = log(1/in_features)
    weight_logvar = jnp.full((out_features, in_features),
                             math.log(1.0 / in_features), dtype=jnp.float32)

    # Once per parameter update (off the per-forward hot path).
    w_kn, sigma_kn = flipout_prepare_params(weight, weight_logvar,
                                            weight_multiplicative_variance=True)

    tn, tk = 128, 128   # grid = (2, 3) at these toy shapes

    out, noise_kn, sign_in, sign_out = variational_flipout_linear(
        x, w_kn, sigma_kn, bias, k_fwd, tile_n=tn, tile_k=tk, return_noise=True)
    out = jax.block_until_ready(out)
    assert out.shape == (B, out_features)

    # Reference built from exactly the operands the kernel sees (bf16 weight /
    # noise / activations, f32 accumulation): tight tolerance.
    w_f = w_kn.astype(jnp.float32)
    nz_f = noise_kn.astype(jnp.float32)
    x_bf = x.astype(jnp.bfloat16).astype(jnp.float32)
    xs_bf = (x * sign_in).astype(jnp.bfloat16).astype(jnp.float32)
    ref = x_bf @ w_f + bias[None, :] + sign_out * (xs_bf @ nz_f)
    assert jnp.allclose(out, ref, atol=2e-3, rtol=2e-3), "flipout output mismatch"

    # bf16 weight quantisation stays close to the full-precision torch forward.
    ref_f32 = x @ weight.T + bias[None, :] + sign_out * ((sign_in * x) @ nz_f)
    assert jnp.allclose(out, ref_f32, atol=1e-1, rtol=5e-2), "bf16 drift too large"

    # Sanity-check the stochastic draws.
    assert bool(jnp.all(jnp.abs(sign_in) == 1.0)), "sign_in not +/-1"
    assert bool(jnp.all(jnp.abs(sign_out) == 1.0)), "sign_out not +/-1"
    mask = jnp.abs(sigma_kn) > 1e-6                       # guard zero-sigma division
    eps_rec = jnp.where(mask, noise_kn.astype(jnp.float32)
                        / jnp.where(mask, sigma_kn, 1.0), 0.0)
    n_eff = jnp.sum(mask)
    eps_mean = jnp.sum(eps_rec) / n_eff
    eps_var = jnp.sum(jnp.where(mask, (eps_rec - eps_mean) ** 2, 0.0)) / n_eff
    assert abs(float(eps_mean)) < 0.1, "eps mean off"
    assert 0.85 < float(jnp.sqrt(eps_var)) < 1.15, "eps std off"

    # Production path must agree with the debug path for the same key.
    out_fast = jax.block_until_ready(variational_flipout_linear(
        x, w_kn, sigma_kn, bias, k_fwd, tile_n=tn, tile_k=tk))
    assert jnp.allclose(out, out_fast, atol=1e-6, rtol=1e-6), "debug/fast mismatch"

    # Key-deterministic draws: different key -> different output.
    out_other = variational_flipout_linear(
        x, w_kn, sigma_kn, bias, jax.random.PRNGKey(123), tile_n=tn, tile_k=tk)
    assert not jnp.allclose(out_fast, out_other), "different key gave identical output"

    # Default (large) tiles clamp to the full small shapes here; result must match.
    out_big = jax.block_until_ready(variational_flipout_linear(
        x, w_kn, sigma_kn, bias, k_fwd))
    assert jnp.allclose(out, out_big, atol=1e-5, rtol=1e-5), "tile-size dependence"

    print("KERNEL_OK")
</pallas_src>

<mosaic_0001>
module attributes {stable_mosaic.version = 11 : i64} {
  func.func @_flipout_kernel(%arg0: i32, %arg1: i32, %arg2: memref<8x128xf32, #tpu.memory_space<vmem>>, %arg3: memref<128x128xbf16, #tpu.memory_space<vmem>>, %arg4: memref<128x128xbf16, #tpu.memory_space<vmem>>, %arg5: memref<1x128xf32, #tpu.memory_space<vmem>>, %arg6: memref<8x128xf32, #tpu.memory_space<vmem>>, %arg7: memref<8x128xf32, #tpu.memory_space<vmem>>, %arg8: memref<8x128xf32, #tpu.memory_space<vmem>>, %arg9: memref<8x128xf32, #tpu.memory_space<vmem>>) attributes {dimension_semantics = [#tpu.dimension_semantics<parallel>, #tpu.dimension_semantics<arbitrary>], iteration_bounds = array<i64: 2, 3>, scalar_prefetch = 0 : i64, scratch_operands = 1 : i64, tpu.core_type = #tpu.core_type<tc>, window_params = [{transform_indices = @transform_0, window_bounds = array<i64: 8, 128>}, {transform_indices = @transform_1, window_bounds = array<i64: 128, 128>}, {transform_indices = @transform_2, window_bounds = array<i64: 128, 128>}, {transform_indices = @transform_3, window_bounds = array<i64: 1, 128>}, {transform_indices = @transform_4, window_bounds = array<i64: 8, 128>}, {transform_indices = @transform_5, window_bounds = array<i64: 8, 128>}, {transform_indices = @transform_6, window_bounds = array<i64: 8, 128>}]} {
    %c0_i32 = arith.constant 0 : i32
    %0 = arith.cmpi eq, %arg1, %c0_i32 : i32
    %1 = arith.extui %0 : i1 to i32
    %c0_i32_0 = arith.constant 0 : i32
    %2 = arith.cmpi ne, %1, %c0_i32_0 : i32
    scf.if %2 {
      %c0_18 = arith.constant 0 : index
      %c0_19 = arith.constant 0 : index
      %21 = vector.load %arg5[%c0_18, %c0_19] : memref<1x128xf32, #tpu.memory_space<vmem>>, vector<1x128xf32>
      %22 = vector.shape_cast %21 : vector<1x128xf32> to vector<1x128xf32>
      %23 = vector.broadcast %22 : vector<1x128xf32> to vector<8x128xf32>
      %c0_20 = arith.constant 0 : index
      %c0_21 = arith.constant 0 : index
      %24 = vector.load %arg8[%c0_20, %c0_21] : memref<8x128xf32, #tpu.memory_space<vmem>>, vector<8x128xf32>
      tpu.vector_store %arg8[%c0_20, %c0_21], %23 {strides = array<i32>} : memref<8x128xf32, #tpu.memory_space<vmem>>, vector<8x128xf32>,
      %cst_22 = arith.constant 0.000000e+00 : f32
      %25 = vector.broadcast %cst_22 : f32 to vector<8x128xf32>
      %c0_23 = arith.constant 0 : index
      %c0_24 = arith.constant 0 : index
      %26 = vector.load %arg9[%c0_23, %c0_24] : memref<8x128xf32, #tpu.memory_space<vmem>>, vector<8x128xf32>
      tpu.vector_store %arg9[%c0_23, %c0_24], %25 {strides = array<i32>} : memref<8x128xf32, #tpu.memory_space<vmem>>, vector<8x128xf32>,
    } else {
    }
    %c0 = arith.constant 0 : index
    %c0_1 = arith.constant 0 : index
    %3 = vector.load %arg2[%c0, %c0_1] : memref<8x128xf32, #tpu.memory_space<vmem>>, vector<8x128xf32>
    %4 = arith.truncf %3 : vector<8x128xf32> to vector<8x128xbf16>
    %c0_2 = arith.constant 0 : index
    %c0_3 = arith.constant 0 : index
    %5 = vector.load %arg6[%c0_2, %c0_3] : memref<8x128xf32, #tpu.memory_space<vmem>>, vector<8x128xf32>
    %6 = arith.mulf %3, %5 : vector<8x128xf32>
    %7 = arith.truncf %6 : vector<8x128xf32> to vector<8x128xbf16>
    %c0_4 = arith.constant 0 : index
    %c0_5 = arith.constant 0 : index
    %8 = vector.load %arg8[%c0_4, %c0_5] : memref<8x128xf32, #tpu.memory_space<vmem>>, vector<8x128xf32>
    %c0_6 = arith.constant 0 : index
    %c0_7 = arith.constant 0 : index
    %9 = vector.load %arg3[%c0_6, %c0_7] : memref<128x128xbf16, #tpu.memory_space<vmem>>, vector<128x128xbf16>
    %cst = arith.constant dense<0.000000e+00> : vector<8x128xf32>
    %10 = tpu.matmul %4, %9, %cst {dimension_numbers = #tpu.dot_dimension_numbers<[1], [0], [0], [1], [0, 0, 1, 1], [], []>} : vector<8x128xbf16>, vector<128x128xbf16>, vector<8x128xf32> -> vector<8x128xf32>
    %11 = arith.addf %8, %10 : vector<8x128xf32>
    %c0_8 = arith.constant 0 : index
    %c0_9 = arith.constant 0 : index
    %12 = vector.load %arg8[%c0_8, %c0_9] : memref<8x128xf32, #tpu.memory_space<vmem>>, vector<8x128xf32>
    tpu.vector_store %arg8[%c0_8, %c0_9], %11 {strides = array<i32>} : memref<8x128xf32, #tpu.memory_space<vmem>>, vector<8x128xf32>,
    %c0_10 = arith.constant 0 : index
    %c0_11 = arith.constant 0 : index
    %13 = vector.load %arg9[%c0_10, %c0_11] : memref<8x128xf32, #tpu.memory_space<vmem>>, vector<8x128xf32>
    %c0_12 = arith.constant 0 : index
    %c0_13 = arith.constant 0 : index
    %14 = vector.load %arg4[%c0_12, %c0_13] : memref<128x128xbf16, #tpu.memory_space<vmem>>, vector<128x128xbf16>
    %cst_14 = arith.constant dense<0.000000e+00> : vector<8x128xf32>
    %15 = tpu.matmul %7, %14, %cst_14 {dimension_numbers = #tpu.dot_dimension_numbers<[1], [0], [0], [1], [0, 0, 1, 1], [], []>} : vector<8x128xbf16>, vector<128x128xbf16>, vector<8x128xf32> -> vector<8x128xf32>
    %16 = arith.addf %13, %15 : vector<8x128xf32>
    %c0_15 = arith.constant 0 : index
    %c0_16 = arith.constant 0 : index
    %17 = vector.load %arg9[%c0_15, %c0_16] : memref<8x128xf32, #tpu.memory_space<vmem>>, vector<8x128xf32>
    tpu.vector_store %arg9[%c0_15, %c0_16], %16 {strides = array<i32>} : memref<8x128xf32, #tpu.memory_space<vmem>>, vector<8x128xf32>,
    %c2_i32 = arith.constant 2 : i32
    %18 = arith.cmpi eq, %arg1, %c2_i32 : i32
    %19 = arith.extui %18 : i1 to i32
    %c0_i32_17 = arith.constant 0 : i32
    %20 = arith.cmpi ne, %19, %c0_i32_17 : i32
    scf.if %20 {
      %c0_18 = arith.constant 0 : index
      %c0_19 = arith.constant 0 : index
      %21 = vector.load %arg8[%c0_18, %c0_19] : memref<8x128xf32, #tpu.memory_space<vmem>>, vector<8x128xf32>
      %c0_20 = arith.constant 0 : index
      %c0_21 = arith.constant 0 : index
      %22 = vector.load %arg7[%c0_20, %c0_21] : memref<8x128xf32, #tpu.memory_space<vmem>>, vector<8x128xf32>
      %c0_22 = arith.constant 0 : index
      %c0_23 = arith.constant 0 : index
      %23 = vector.load %arg9[%c0_22, %c0_23] : memref<8x128xf32, #tpu.memory_space<vmem>>, vector<8x128xf32>
      %24 = arith.mulf %22, %23 : vector<8x128xf32>
      %25 = arith.addf %21, %24 : vector<8x128xf32>
      %c0_24 = arith.constant 0 : index
      %c0_25 = arith.constant 0 : index
      %26 = vector.load %arg8[%c0_24, %c0_25] : memref<8x128xf32, #tpu.memory_space<vmem>>, vector<8x128xf32>
      tpu.vector_store %arg8[%c0_24, %c0_25], %25 {strides = array<i32>} : memref<8x128xf32, #tpu.memory_space<vmem>>, vector<8x128xf32>,
    } else {
    }
    return
  }
  func.func @transform_0(%arg0: i32, %arg1: i32) -> (i32, i32) {
    %c0_i32 = arith.constant 0 : i32
    %c0_i32_0 = arith.constant 0 : i32
    return %c0_i32, %arg1 : i32, i32
  }
  func.func @transform_1(%arg0: i32, %arg1: i32) -> (i32, i32) {
    %c0_i32 = arith.constant 0 : i32
    return %arg1, %arg0 : i32, i32
  }
  func.func @transform_2(%arg0: i32, %arg1: i32) -> (i32, i32) {
    %c0_i32 = arith.constant 0 : i32
    return %arg1, %arg0 : i32, i32
  }
  func.func @transform_3(%arg0: i32, %arg1: i32) -> (i32, i32) {
    %c0_i32 = arith.constant 0 : i32
    %c0_i32_0 = arith.constant 0 : i32
    return %c0_i32, %arg0 : i32, i32
  }
  func.func @transform_4(%arg0: i32, %arg1: i32) -> (i32, i32) {
    %c0_i32 = arith.constant 0 : i32
    %c0_i32_0 = arith.constant 0 : i32
    return %c0_i32, %arg1 : i32, i32
  }
  func.func @transform_5(%arg0: i32, %arg1: i32) -> (i32, i32) {
    %c0_i32 = arith.constant 0 : i32
    %c0_i32_0 = arith.constant 0 : i32
    return %c0_i32, %arg0 : i32, i32
  }
  func.func @transform_6(%arg0: i32, %arg1: i32) -> (i32, i32) {
    %c0_i32 = arith.constant 0 : i32
    %c0_i32_0 = arith.constant 0 : i32
    return %c0_i32, %arg0 : i32, i32
  }
}

</mosaic_0001>

<llo_original>
// kernel: tpu_custom_call.1
$region0: #{tpu_custom_call.1}
  #allocation0 [shape = 'u32[]', space=smem, size = 0x4, offset = 0x4, fixed_abs, tag = 'smem constant byte address 0x4 - core index']
  #allocation1 [shape = 'u32[144,128]{1,0:T(1,128)}', space=vmem, size = 0x12000, scoped, tag = 'internal scratch']
  #allocation2 [shape = 'f32[8,128]{1,0:T(8,128)}', space=vmem, size = 0x1000, scoped, tag = 'scratch operand']
  %s0 = inlined_call_operand.hbm [shape: f32[8,384], index: 0, kind: input, shape index: {}]
  %s1 = inlined_call_operand.hbm [shape: bf16[384,256], index: 1, kind: input, shape index: {}]
  %s2 = inlined_call_operand.hbm [shape: bf16[384,256], index: 2, kind: input, shape index: {}]
  %s3 = inlined_call_operand.vmem [shape: f32[1,256], index: 3, kind: input, shape index: {}]
  %s4 = inlined_call_operand.hbm [shape: f32[8,384], index: 4, kind: input, shape index: {}]
  %s5 = inlined_call_operand.vmem [shape: f32[8,256], index: 5, kind: input, shape index: {}]
  %s6 = inlined_call_operand.hbm [shape: f32[8,256], index: 6, kind: output, shape index: {}]
  %s7 = sld [smem:[#allocation0]]
  $region81: #{tpu_custom_call.1} parent=0
    _
  %s9 = ssub.s32 1, %s7
  %s10 = scalar_select 0, %s9, %s7
  $region1: #{tpu_custom_call.1} parent=0
    #allocation3 [shape = 'u8[8192]{0}', space=vmem, size = 0x2000, scoped, tag = 'input window, operand 0']
    #allocation4 [shape = 's32[2]{0}', space=sflag, size = 0x8, scoped, tag = 'scoped memory for tpu_custom_call.1']
    #allocation5 [shape = 's32[2]{0}', space=sflag, size = 0x8, scoped, tag = 'scoped memory for tpu_custom_call.1']
    #allocation6 [shape = 'u8[65536]{0}', space=vmem, size = 0x10000, scoped, tag = 'input window, operand 1']
    #allocation7 [shape = 's32[2]{0}', space=sflag, size = 0x8, scoped, tag = 'scoped memory for tpu_custom_call.1']
    #allocation8 [shape = 'u8[65536]{0}', space=vmem, size = 0x10000, scoped, tag = 'input window, operand 2']
    #allocation9 [shape = 'u8[8192]{0}', space=vmem, size = 0x2000, scoped, tag = 'input window, operand 4']
    #allocation10 [shape = 's32[2]{0}', space=sflag, size = 0x8, scoped, tag = 'scoped memory for tpu_custom_call.1']
    #allocation11 [shape = 'u8[8192]{0}', space=vmem, size = 0x2000, scoped, tag = 'output window, operand 0']
    %11 = vsyncpa [#allocation4], 0
    %s12 = scalar_lea.sflag [#allocation4], 1
    %13 = vsyncpa %s12, 0
    %14 = vsyncpa [#allocation7], 0
    %s15 = scalar_lea.sflag [#allocation7], 1
    %16 = vsyncpa %s15, 0
    %17 = vsyncpa [#allocation10], 0
    %s18 = scalar_lea.sflag [#allocation10], 1
    %19 = vsyncpa %s18, 0
    %20 = vsyncpa [#allocation5], 0
    %s21 = scalar_lea.sflag [#allocation5], 1
    %22 = vsyncpa %s21, 0
    loop: start=0, step=1, limit=8
    $region2: #{tpu_custom_call.1} parent=1 // loop_pre_header
      _
    $region3: #{tpu_custom_call.1} parent=1 // loop_header
      %s24 = sphi 0, %s28
      %p25 = scmp.ge.s32.totalorder %s24, 8
      %s31 = sphi 0, %s43
      %s32 = sphi 0, %s39
      %s33 = sphi 0, %s31
      %s34 = sphi 0, %s32
      %s35 = sphi 0, %s33
      %s36 = sphi 0, %s34
      %s46 = sphi 0, %s48
      %s49 = sphi 0, %s46
      %s50 = sphi 0, %s49
      %s66 = sphi 0, %s50
      %s74 = sphi 0, %s76
      %s77 = sphi 0, %s74
      %s78 = sphi 0, %s77
      %s94 = sphi 0, %s78
      %s102 = sphi 0, %s104
      %s105 = sphi 0, %s102
      %s106 = sphi 0, %s105
      %s122 = sphi 0, %s106
      %s128 = sphi 0, %s130
      %s131 = sphi 0, %s128
      %s132 = sphi 0, %s131
      %s148 = sphi 0, %s132
      %s154 = sphi 0, %s156
      %s157 = sphi 0, %s154
      %s158 = sphi 0, %s157
      %s174 = sphi 0, %s158
      %s180 = sphi 0, %s182
      %s183 = sphi 0, %s180
      %s184 = sphi 0, %s183
      %s200 = sphi 0, %s184
      %s206 = sphi 0, %s208
      %s209 = sphi 0, %s206
      %s210 = sphi 0, %s209
      %s226 = sphi 0, %s210
    $region4: #{tpu_custom_call.1} parent=1 // loop_header_branch
      %27 = sbr.rel (%p25) target = $region8
    $region5: #{tpu_custom_call.1} parent=1 // loop_body
      %s29 = ssub.s32 %s24, 1
      %s30 = ssub.s32 %s24, 2
      %s37 = sadd.s32 1, %s32
      %p38 = scmp.ge.s32.totalorder %s37, 3
      %s39 = scalar_select %p38, 0, %s37
      %s40 = sadd.s32 1, %s31
      %s41 = scalar_select %p38, %s40, %s31
      %p42 = scmp.ge.s32.totalorder %s41, 2
      %s43 = scalar_select %p42, 0, %s41
      %s44 = ssub.s32 %s32, %s39
      %p45 = scmp.eq.s32.totalorder %s44, 0
      %s47 = sadd.s32 %s46, 1
      %s48 = scalar_select %p45, %s46, %s47
      %p51 = pneg %p45
      %p52 = scmp.eq.s32.totalorder %s24, 5
      %p53 = por %p51, %p52
      %p54 = scmp.ne.s32.totalorder %s46, %s49
      %p55 = scmp.eq.s32.totalorder %s24, 0
      %p56 = por %p54, %p55
      %p57 = scmp.ne.s32.totalorder %s46, %s49
      %p58 = scmp.eq.s32.totalorder %s29, 5
      %p59 = por %p57, %p58
      %p60 = scmp.ne.s32.totalorder %s49, %s50
      %p61 = scmp.eq.s32.totalorder %s29, 0
      %p62 = por %p60, %p61
      %p63 = scmp.ne.s32.totalorder %s49, %s50
      %p64 = scmp.eq.s32.totalorder %s30, 5
      %p65 = por %p63, %p64
      %p67 = scmp.ne.s32.totalorder %s50, %s66
      %p68 = scmp.eq.s32.totalorder %s30, 0
      %p69 = por %p67, %p68
      %s70 = ssub.s32 %s32, %s39
      %s71 = ssub.s32 %s31, %s43
      %s72 = sor.u32 %s70, %s71
      %p73 = scmp.eq.s32.totalorder %s72, 0
      %s75 = sadd.s32 %s74, 1
      %s76 = scalar_select %p73, %s74, %s75
      %p79 = pneg %p73
      %p80 = scmp.eq.s32.totalorder %s24, 5
      %p81 = por %p79, %p80
      %p82 = scmp.ne.s32.totalorder %s74, %s77
      %p83 = scmp.eq.s32.totalorder %s24, 0
      %p84 = por %p82, %p83
      %p85 = scmp.ne.s32.totalorder %s74, %s77
      %p86 = scmp.eq.s32.totalorder %s29, 5
      %p87 = por %p85, %p86
      %p88 = scmp.ne.s32.totalorder %s77, %s78
      %p89 = scmp.eq.s32.totalorder %s29, 0
      %p90 = por %p88, %p89
      %p91 = scmp.ne.s32.totalorder %s77, %s78
      %p92 = scmp.eq.s32.totalorder %s30, 5
      %p93 = por %p91, %p92
      %p95 = scmp.ne.s32.totalorder %s78, %s94
      %p96 = scmp.eq.s32.totalorder %s30, 0
      %p97 = por %p95, %p96
      %s98 = ssub.s32 %s32, %s39
      %s99 = ssub.s32 %s31, %s43
      %s100 = sor.u32 %s98, %s99
      %p101 = scmp.eq.s32.totalorder %s100, 0
      %s103 = sadd.s32 %s102, 1
      %s104 = scalar_select %p101, %s102, %s103
      %p107 = pneg %p101
      %p108 = scmp.eq.s32.totalorder %s24, 5
      %p109 = por %p107, %p108
      %p110 = scmp.ne.s32.totalorder %s102, %s105
      %p111 = scmp.eq.s32.totalorder %s24, 0
      %p112 = por %p110, %p111
      %p113 = scmp.ne.s32.totalorder %s102, %s105
      %p114 = scmp.eq.s32.totalorder %s29, 5
      %p115 = por %p113, %p114
      %p116 = scmp.ne.s32.totalorder %s105, %s106
      %p117 = scmp.eq.s32.totalorder %s29, 0
      %p118 = por %p116, %p117
      %p119 = scmp.ne.s32.totalorder %s105, %s106
      %p120 = scmp.eq.s32.totalorder %s30, 5
      %p121 = por %p119, %p120
      %p123 = scmp.ne.s32.totalorder %s106, %s122
      %p124 = scmp.eq.s32.totalorder %s30, 0
      %p125 = por %p123, %p124
      %s126 = ssub.s32 %s31, %s43
      %p127 = scmp.eq.s32.totalorder %s126, 0
      %s129 = sadd.s32 %s128, 1
      %s130 = scalar_select %p127, %s128, %s129
      %p133 = pneg %p127
      %p134 = scmp.eq.s32.totalorder %s24, 5
      %p135 = por %p133, %p134
      %p136 = scmp.ne.s32.totalorder %s128, %s131
      %p137 = scmp.eq.s32.totalorder %s24, 0
      %p138 = por %p136, %p137
      %p139 = scmp.ne.s32.totalorder %s128, %s131
      %p140 = scmp.eq.s32.totalorder %s29, 5
      %p141 = por %p139, %p140
      %p142 = scmp.ne.s32.totalorder %s131, %s132
      %p143 = scmp.eq.s32.totalorder %s29, 0
      %p144 = por %p142, %p143
      %p145 = scmp.ne.s32.totalorder %s131, %s132
      %p146 = scmp.eq.s32.totalorder %s30, 5
      %p147 = por %p145, %p146
      %p149 = scmp.ne.s32.totalorder %s132, %s148
      %p150 = scmp.eq.s32.totalorder %s30, 0
      %p151 = por %p149, %p150
      %s152 = ssub.s32 %s32, %s39
      %p153 = scmp.eq.s32.totalorder %s152, 0
      %s155 = sadd.s32 %s154, 1
      %s156 = scalar_select %p153, %s154, %s155
      %p159 = pneg %p153
      %p160 = scmp.eq.s32.totalorder %s24, 5
      %p161 = por %p159, %p160
      %p162 = scmp.ne.s32.totalorder %s154, %s157
      %p163 = scmp.eq.s32.totalorder %s24, 0
      %p164 = por %p162, %p163
      %p165 = scmp.ne.s32.totalorder %s154, %s157
      %p166 = scmp.eq.s32.totalorder %s29, 5
      %p167 = por %p165, %p166
      %p168 = scmp.ne.s32.totalorder %s157, %s158
      %p169 = scmp.eq.s32.totalorder %s29, 0
      %p170 = por %p168, %p169
      %p171 = scmp.ne.s32.totalorder %s157, %s158
      %p172 = scmp.eq.s32.totalorder %s30, 5
      %p173 = por %p171, %p172
      %p175 = scmp.ne.s32.totalorder %s158, %s174
      %p176 = scmp.eq.s32.totalorder %s30, 0
      %p177 = por %p175, %p176
      %s178 = ssub.s32 %s31, %s43
      %p179 = scmp.eq.s32.totalorder %s178, 0
      %s181 = sadd.s32 %s180, 1
      %s182 = scalar_select %p179, %s180, %s181
      %p185 = pneg %p179
      %p186 = scmp.eq.s32.totalorder %s24, 5
      %p187 = por %p185, %p186
      %p188 = scmp.ne.s32.totalorder %s180, %s183
      %p189 = scmp.eq.s32.totalorder %s24, 0
      %p190 = por %p188, %p189
      %p191 = scmp.ne.s32.totalorder %s180, %s183
      %p192 = scmp.eq.s32.totalorder %s29, 5
      %p193 = por %p191, %p192
      %p194 = scmp.ne.s32.totalorder %s183, %s184
      %p195 = scmp.eq.s32.totalorder %s29, 0
      %p196 = por %p194, %p195
      %p197 = scmp.ne.s32.totalorder %s183, %s184
      %p198 = scmp.eq.s32.totalorder %s30, 5
      %p199 = por %p197, %p198
      %p201 = scmp.ne.s32.totalorder %s184, %s200
      %p202 = scmp.eq.s32.totalorder %s30, 0
      %p203 = por %p201, %p202
      %s204 = ssub.s32 %s31, %s43
      %p205 = scmp.eq.s32.totalorder %s204, 0
      %s207 = sadd.s32 %s206, 1
      %s208 = scalar_select %p205, %s206, %s207
      %p211 = pneg %p205
      %p212 = scmp.eq.s32.totalorder %s24, 5
      %p213 = por %p211, %p212
      %p214 = scmp.ne.s32.totalorder %s206, %s209
      %p215 = scmp.eq.s32.totalorder %s24, 0
      %p216 = por %p214, %p215
      %p217 = scmp.ne.s32.totalorder %s206, %s209
      %p218 = scmp.eq.s32.totalorder %s29, 5
      %p219 = por %p217, %p218
      %p220 = scmp.ne.s32.totalorder %s209, %s210
      %p221 = scmp.eq.s32.totalorder %s29, 0
      %p222 = por %p220, %p221
      %p223 = scmp.ne.s32.totalorder %s209, %s210
      %p224 = scmp.eq.s32.totalorder %s30, 5
      %p225 = por %p223, %p224
      %p227 = scmp.ne.s32.totalorder %s210, %s226
      %p228 = scmp.eq.s32.totalorder %s30, 0
      %p229 = por %p227, %p228
      %p230 = scmp.le.s32.totalorder 1, %s24
      %p231 = scmp.lt.s32.totalorder %s24, 7
      %p232 = pnand %p230, %p231
      %p233 = pneg %p232
      // Predicated region
      $region9: #{tpu_custom_call.1} parent=5 // pred_check
        _
      $region10: #{tpu_custom_call.1} parent=5 // pred_check_branch
        %235 = sbr.rel (%p232) target = $region12
      $region11: #{tpu_custom_call.1} parent=5 // pred_region
        %s236 = ssub.s32 %s24, 1
      $region12: #{tpu_custom_call.1} parent=5 // pred_fallthru
        _
      %p237 = scmp.lt.s32.totalorder %s24, 6
      // Predicated region
      $region13: #{tpu_custom_call.1} parent=5 // pred_check
        %p238 = pneg %p237
      $region14: #{tpu_custom_call.1} parent=5 // pred_check_branch
        %240 = sbr.rel (%p238) target = $region16
      $region15: #{tpu_custom_call.1} parent=5 // pred_region
        // Predicated region
        $region17: #{tpu_custom_call.1} parent=15 // pred_check
          %p241 = pneg %p56
        $region18: #{tpu_custom_call.1} parent=15 // pred_check_branch
          %243 = sbr.rel (%p241) target = $region20
        $region19: #{tpu_custom_call.1} parent=15 // pred_region
          %s244 = sand.u32 %s46, 1
          %s245 = scalar_lea.sflag [#allocation4], %s244
          %s246 = sand.u32 %s46, 1
          %s247 = smul.addr %s246, 8
          %s248 = scalar_lea.vmem [#allocation3], %s247
          %s250 = ssub.s32 128, 128
          %251 = vsyncadd %s245, %s250
          %s252 = smul.addr %s32, 128
          %s253 = scalar_lea.hbm %s0, %s252
          %s255 = sshll.u32 %s248, 4
          %s256 = int_to_ptr.vmem [resolvable:$true] %s255
          %258 = dma.hbm_to_vmem [thread:$0]  %s253, 128, %s256, %s245
        $region20: #{tpu_custom_call.1} parent=15 // pred_fallthru
          _
        // Predicated region
        $region21: #{tpu_custom_call.1} parent=15 // pred_check
          %p259 = pneg %p84
        $region22: #{tpu_custom_call.1} parent=15 // pred_check_branch
          %261 = sbr.rel (%p259) target = $region24
        $region23: #{tpu_custom_call.1} parent=15 // pred_region
          %s262 = sand.u32 %s24, 1
          %s263 = scalar_lea.sflag [#allocation7], %s262
          %s264 = sand.u32 %s74, 1
          %s265 = smul.addr %s264, 64
          %s266 = scalar_lea.vmem [#allocation6], %s265
          %s267 = smul.u32 16, %s32
          %s269 = ssub.s32 1024, 1024
          %270 = vsyncadd %s263, %s269
          %s271 = smul.addr %s267, 2
          %s272 = sadd.s32 %s31, %s271
          %s273 = smul.addr %s272, 64
          %s274 = scalar_lea.hbm %s1, %s273
          %s275 = sshll.u32 %s266, 4
          %s276 = int_to_ptr.vmem [resolvable:$true] %s275
          %281 = dma.hbm_to_vmem [thread:$0]  %s274, 1024, %s276, %s263, 128, 64, 4
        $region24: #{tpu_custom_call.1} parent=15 // pred_fallthru
          _
        // Predicated region
        $region25: #{tpu_custom_call.1} parent=15 // pred_check
          %p282 = pneg %p112
        $region26: #{tpu_custom_call.1} parent=15 // pred_check_branch
          %284 = sbr.rel (%p282) target = $region28
        $region27: #{tpu_custom_call.1} parent=15 // pred_region
          %s285 = sand.u32 %s24, 1
          %s286 = scalar_lea.sflag [#allocation7], %s285
          %s287 = sand.u32 %s102, 1
          %s288 = smul.addr %s287, 64
          %s289 = scalar_lea.vmem [#allocation8], %s288
          %s290 = smul.u32 16, %s32
          %s292 = ssub.s32 1024, 1024
          %293 = vsyncadd %s286, %s292
          %s294 = smul.addr %s290, 2
          %s295 = sadd.s32 %s31, %s294
          %s296 = smul.addr %s295, 64
          %s297 = scalar_lea.hbm %s2, %s296
          %s298 = sshll.u32 %s289, 4
          %s299 = int_to_ptr.vmem [resolvable:$true] %s298
          %304 = dma.hbm_to_vmem [thread:$0]  %s297, 1024, %s299, %s286, 128, 64, 4
        $region28: #{tpu_custom_call.1} parent=15 // pred_fallthru
          _
        // Predicated region
        $region29: #{tpu_custom_call.1} parent=15 // pred_check
          %p305 = pneg %p138
        $region30: #{tpu_custom_call.1} parent=15 // pred_check_branch
          %307 = sbr.rel (%p305) target = $region32
        $region31: #{tpu_custom_call.1} parent=15 // pred_region
          %p308 = scmp.lt.s32.totalorder %s31, 1
          %s309 = scalar_select %p308, %s31, 1
          %s310 = scalar_lea.vmem %s3, %s309
        $region32: #{tpu_custom_call.1} parent=15 // pred_fallthru
          _
        // Predicated region
        $region33: #{tpu_custom_call.1} parent=15 // pred_check
          %p311 = pneg %p164
        $region34: #{tpu_custom_call.1} parent=15 // pred_check_branch
          %313 = sbr.rel (%p311) target = $region36
        $region35: #{tpu_custom_call.1} parent=15 // pred_region
          %s314 = sand.u32 %s154, 1
          %s315 = scalar_lea.sflag [#allocation10], %s314
          %s316 = sand.u32 %s154, 1
          %s317 = smul.addr %s316, 8
          %s318 = scalar_lea.vmem [#allocation9], %s317
          %s320 = ssub.s32 128, 128
          %321 = vsyncadd %s315, %s320
          %s322 = smul.addr %s32, 128
          %s323 = scalar_lea.hbm %s4, %s322
          %s325 = sshll.u32 %s318, 4
          %s326 = int_to_ptr.vmem [resolvable:$true] %s325
          %328 = dma.hbm_to_vmem [thread:$0]  %s323, 128, %s326, %s315
        $region36: #{tpu_custom_call.1} parent=15 // pred_fallthru
          _
        // Predicated region
        $region37: #{tpu_custom_call.1} parent=15 // pred_check
          %p329 = pneg %p190
        $region38: #{tpu_custom_call.1} parent=15 // pred_check_branch
          %331 = sbr.rel (%p329) target = $region40
        $region39: #{tpu_custom_call.1} parent=15 // pred_region
          %p332 = scmp.lt.s32.totalorder %s31, 1
          %s333 = scalar_select %p332, %s31, 1
          %s334 = smul.addr %s333, 8
          %s335 = scalar_lea.vmem %s5, %s334
        $region40: #{tpu_custom_call.1} parent=15 // pred_fallthru
          _
      $region16: #{tpu_custom_call.1} parent=5 // pred_fallthru
        _
      %p336 = scmp.le.s32.totalorder 1, %s24
      %p337 = scmp.lt.s32.totalorder %s24, 7
      %p338 = pnand %p336, %p337
      %p339 = pneg %p338
      // Predicated region
      $region41: #{tpu_custom_call.1} parent=5 // pred_check
        _
      $region42: #{tpu_custom_call.1} parent=5 // pred_check_branch
        %341 = sbr.rel (%p338) target = $region44
      $region43: #{tpu_custom_call.1} parent=5 // pred_region
        %s342 = ssub.s32 %s24, 1
        %s343 = sand.u32 %s49, 1
        %s344 = scalar_lea.sflag [#allocation4], %s343
        %s345 = sand.u32 %s49, 1
        %s346 = smul.addr %s345, 8
        %s347 = scalar_lea.vmem [#allocation3], %s346
        // Predicated region
        $region45: #{tpu_custom_call.1} parent=43 // pred_check
          %p348 = pneg %p62
        $region46: #{tpu_custom_call.1} parent=43 // pred_check_branch
          %350 = sbr.rel (%p348) target = $region48
        $region47: #{tpu_custom_call.1} parent=43 // pred_region
          %351 = dma.done %s344, 128
        $region48: #{tpu_custom_call.1} parent=43 // pred_fallthru
          _
        %s352 = sand.u32 %s29, 1
        %s353 = scalar_lea.sflag [#allocation7], %s352
        %s354 = sand.u32 %s77, 1
        %s355 = smul.addr %s354, 64
        %s356 = scalar_lea.vmem [#allocation6], %s355
        // Predicated region
        $region49: #{tpu_custom_call.1} parent=43 // pred_check
          %p357 = pneg %p90
        $region50: #{tpu_custom_call.1} parent=43 // pred_check_branch
          %359 = sbr.rel (%p357) target = $region52
        $region51: #{tpu_custom_call.1} parent=43 // pred_region
          %360 = dma.done %s353, 1024
        $region52: #{tpu_custom_call.1} parent=43 // pred_fallthru
          _
        %s361 = sand.u32 %s29, 1
        %s362 = scalar_lea.sflag [#allocation7], %s361
        %s363 = sand.u32 %s105, 1
        %s364 = smul.addr %s363, 64
        %s365 = scalar_lea.vmem [#allocation8], %s364
        // Predicated region
        $region53: #{tpu_custom_call.1} parent=43 // pred_check
          %p366 = pneg %p118
        $region54: #{tpu_custom_call.1} parent=43 // pred_check_branch
          %368 = sbr.rel (%p366) target = $region56
        $region55: #{tpu_custom_call.1} parent=43 // pred_region
          %369 = dma.done %s362, 1024
        $region56: #{tpu_custom_call.1} parent=43 // pred_fallthru
          _
        %s370 = sand.u32 %s157, 1
        %s371 = scalar_lea.sflag [#allocation10], %s370
        %s372 = sand.u32 %s157, 1
        %s373 = smul.addr %s372, 8
        %s374 = scalar_lea.vmem [#allocation9], %s373
        // Predicated region
        $region57: #{tpu_custom_call.1} parent=43 // pred_check
          %p375 = pneg %p170
        $region58: #{tpu_custom_call.1} parent=43 // pred_check_branch
          %377 = sbr.rel (%p375) target = $region60
        $region59: #{tpu_custom_call.1} parent=43 // pred_region
          %378 = dma.done %s371, 128
        $region60: #{tpu_custom_call.1} parent=43 // pred_fallthru
          _
        %s379 = sand.u32 %s49, 1
        %s380 = scalar_lea.sflag [#allocation4], %s379
        %s381 = sand.u32 %s49, 1
        %s382 = smul.addr %s381, 8
        %s383 = scalar_lea.vmem [#allocation3], %s382
        %p384 = pneg %p62
        %p385 = pneg %p59
        %s386 = sand.u32 %s29, 1
        %s387 = scalar_lea.sflag [#allocation7], %s386
        %s388 = sand.u32 %s77, 1
        %s389 = smul.addr %s388, 64
        %s390 = scalar_lea.vmem [#allocation6], %s389
        %p391 = pneg %p90
        %p392 = pneg %p87
        %s393 = sand.u32 %s29, 1
        %s394 = scalar_lea.sflag [#allocation7], %s393
        %s395 = sand.u32 %s105, 1
        %s396 = smul.addr %s395, 64
        %s397 = scalar_lea.vmem [#allocation8], %s396
        %p398 = pneg %p118
        %p399 = pneg %p115
        %p400 = scmp.lt.s32.totalorder %s33, 1
        %s401 = scalar_select %p400, %s33, 1
        %s402 = scalar_lea.vmem %s3, %s401
        %p403 = pneg %p144
        %p404 = pneg %p141
        %s405 = sand.u32 %s157, 1
        %s406 = scalar_lea.sflag [#allocation10], %s405
        %s407 = sand.u32 %s157, 1
        %s408 = smul.addr %s407, 8
        %s409 = scalar_lea.vmem [#allocation9], %s408
        %p410 = pneg %p170
        %p411 = pneg %p167
        %p412 = scmp.lt.s32.totalorder %s33, 1
        %s413 = scalar_select %p412, %s33, 1
        %s414 = smul.addr %s413, 8
        %s415 = scalar_lea.vmem %s5, %s414
        %p416 = pneg %p196
        %p417 = pneg %p193
        %p418 = pneg %p222
        %p419 = pneg %p219
        %s420 = sand.u32 %s209, 1
        %s421 = scalar_lea.sflag [#allocation5], %s420
        %s422 = sand.u32 %s209, 1
        %s423 = smul.addr %s422, 8
        %s424 = scalar_lea.vmem [#allocation11], %s423
        %s425 = smul.u32 16, %s34
        %s426 = smul.u32 16, %s34
        %p427 = scmp.lt.s32.totalorder %s33, 1
        %s428 = scalar_select %p427, %s33, 1
        %s429 = scalar_lea.vmem %s3, %s428
        %p430 = scmp.lt.s32.totalorder %s33, 1
        %s431 = scalar_select %p430, %s33, 1
        %s432 = smul.addr %s431, 8
        %s433 = scalar_lea.vmem %s5, %s432
        %p435 = scmp.eq.s32.totalorder %s34, 0
        // Predicated region
        $region61: #{tpu_custom_call.1} parent=43 // pred_check
          %p436 = pneg %p435
        $region62: #{tpu_custom_call.1} parent=43 // pred_check_branch
          %438 = sbr.rel (%p436) target = $region64
        $region63: #{tpu_custom_call.1} parent=43 // pred_region
          %v439 = vld [vmem:[%s429] sm:$0x1]
          %v441 = vlaneseq
          %v442 = vshrl.u32 %v441, 7
          %v443 = vsub.s32 0, %v442
          %v444 = vrot.slane %v439, %v443
          %446 = vst [vmem:[%s424] sm:$0xff] %v444
          %447 = vst [vmem:[#allocation2] sm:$0xff] 0.0
        $region64: #{tpu_custom_call.1} parent=43 // pred_fallthru
          _
        %v448 = vld [vmem:[%s347] sm:$0xff]
        %v449 = vpack.c.bf16 %v448, %v448
        %v450 = vld [vmem:[%s374] sm:$0xff]
        %v451 = vmul.f32 %v448, %v450
        %v452 = vpack.c.bf16 %v451, %v451
        %v453 = vld [vmem:[%s424] sm:$0xff]
        %v454 = vld [vmem:[%s356] sm:$0xf]
        %v455 = vld [vmem:[%s356 + $0x4] sm:$0xf]
        %v456 = vld [vmem:[%s356 + $0x8] sm:$0xf]
        %v457 = vld [vmem:[%s356 + $0xc] sm:$0xf]
        %v458 = vld [vmem:[%s356 + $0x10] sm:$0xf]
        %v459 = vld [vmem:[%s356 + $0x14] sm:$0xf]
        %v460 = vld [vmem:[%s356 + $0x18] sm:$0xf]
        %v461 = vld [vmem:[%s356 + $0x1c] sm:$0xf]
        %v462 = vld [vmem:[%s356 + $0x20] sm:$0xf]
        %v463 = vld [vmem:[%s356 + $0x24] sm:$0xf]
        %v464 = vld [vmem:[%s356 + $0x28] sm:$0xf]
        %v465 = vld [vmem:[%s356 + $0x2c] sm:$0xf]
        %v466 = vld [vmem:[%s356 + $0x30] sm:$0xf]
        %v467 = vld [vmem:[%s356 + $0x34] sm:$0xf]
        %v468 = vld [vmem:[%s356 + $0x38] sm:$0xf]
        %v469 = vld [vmem:[%s356 + $0x3c] sm:$0xf]
        %v486 = vunpack.c.l.b16 %v454
        %v487 = vunpack.c.l.b16 %v455
        %v488 = vunpack.c.l.b16 %v456
        %v489 = vunpack.c.l.b16 %v457
        %v490 = vunpack.c.l.b16 %v458
        %v491 = vunpack.c.l.b16 %v459
        %v492 = vunpack.c.l.b16 %v460
        %v493 = vunpack.c.l.b16 %v461
        %v494 = vunpack.c.l.b16 %v462
        %v495 = vunpack.c.l.b16 %v463
        %v496 = vunpack.c.l.b16 %v464
        %v497 = vunpack.c.l.b16 %v465
        %v498 = vunpack.c.l.b16 %v466
        %v499 = vunpack.c.l.b16 %v467
        %v500 = vunpack.c.l.b16 %v468
        %v501 = vunpack.c.l.b16 %v469
        %v502 = vpack.c.b16 %v487, %v486
        %v503 = vpack.c.b16 %v489, %v488
        %v504 = vpack.c.b16 %v491, %v490
        %v505 = vpack.c.b16 %v493, %v492
        %v506 = vpack.c.b16 %v495, %v494
        %v507 = vpack.c.b16 %v497, %v496
        %v508 = vpack.c.b16 %v499, %v498
        %v509 = vpack.c.b16 %v501, %v500
        %518 = vmatprep.subr.bf16.mxu0 0
        %519 = vmatpush1.bf16.msra.mxu0 %v502
        %520 = vmatprep.subr.bf16.mxu0 0
        %521 = vmatpush1.bf16.msra.mxu0 %v503
        %522 = vmatprep.subr.bf16.mxu0 0
        %523 = vmatpush1.bf16.msra.mxu0 %v504
        %524 = vmatprep.subr.bf16.mxu0 0
        %525 = vmatpush1.bf16.msra.mxu0 %v505
        %526 = vmatprep.subr.bf16.mxu0 0
        %527 = vmatpush1.bf16.msra.mxu0 %v506
        %528 = vmatprep.subr.bf16.mxu0 0
        %529 = vmatpush1.bf16.msra.mxu0 %v507
        %530 = vmatprep.subr.bf16.mxu0 0
        %531 = vmatpush1.bf16.msra.mxu0 %v508
        %532 = vmatprep.subr.bf16.mxu0 0
        %533 = vmatpush1.bf16.msra.mxu0 %v509
        %534 = vmatprep.subr.bf16.mxu0 0
        %535 = vmatpush1.bf16.msra.mxu0 0
        %536 = vmatprep.subr.bf16.mxu0 0
        %537 = vmatpush1.bf16.msra.mxu0 0
        %538 = vmatprep.subr.bf16.mxu0 0
        %539 = vmatpush1.bf16.msra.mxu0 0
        %540 = vmatprep.subr.bf16.mxu0 0
        %541 = vmatpush1.bf16.msra.mxu0 0
        %542 = vmatprep.subr.bf16.mxu0 0
        %543 = vmatpush1.bf16.msra.mxu0 0
        %544 = vmatprep.subr.bf16.mxu0 0
        %545 = vmatpush1.bf16.msra.mxu0 0
        %546 = vmatprep.subr.bf16.mxu0 0
        %547 = vmatpush1.bf16.msra.mxu0 0
        %548 = vmatprep.subr.bf16.mxu0 0
        %549 = vmatpush1.bf16.msra.mxu0 0
        %550 = vmatprep.mubr.bf16.mxu0 0
        %551 = vmatmul.mubr.bf16.gmra.mrb[0].mxu0 %v449
        %v552 = vpop.f32.mrb[0].mxu0
        %v553 = vadd.f32 0.0, %v552
        %v554 = vpop.f32.mrb[0].mxu0
        %v555 = vpop.f32.mrb[0].mxu0
        %v556 = vpop.f32.mrb[0].mxu0
        %557 = vdwg.mxu0
        %v558 = vadd.f32 %v453, %v553
        %559 = vst [vmem:[%s424] sm:$0xff] %v558
        %v560 = vld [vmem:[#allocation2] sm:$0xff]
        %v561 = vld [vmem:[%s365] sm:$0xf]
        %v562 = vld [vmem:[%s365 + $0x4] sm:$0xf]
        %v563 = vld [vmem:[%s365 + $0x8] sm:$0xf]
        %v564 = vld [vmem:[%s365 + $0xc] sm:$0xf]
        %v565 = vld [vmem:[%s365 + $0x10] sm:$0xf]
        %v566 = vld [vmem:[%s365 + $0x14] sm:$0xf]
        %v567 = vld [vmem:[%s365 + $0x18] sm:$0xf]
        %v568 = vld [vmem:[%s365 + $0x1c] sm:$0xf]
        %v569 = vld [vmem:[%s365 + $0x20] sm:$0xf]
        %v570 = vld [vmem:[%s365 + $0x24] sm:$0xf]
        %v571 = vld [vmem:[%s365 + $0x28] sm:$0xf]
        %v572 = vld [vmem:[%s365 + $0x2c] sm:$0xf]
        %v573 = vld [vmem:[%s365 + $0x30] sm:$0xf]
        %v574 = vld [vmem:[%s365 + $0x34] sm:$0xf]
        %v575 = vld [vmem:[%s365 + $0x38] sm:$0xf]
        %v576 = vld [vmem:[%s365 + $0x3c] sm:$0xf]
        %v593 = vunpack.c.l.b16 %v561
        %v594 = vunpack.c.l.b16 %v562
        %v595 = vunpack.c.l.b16 %v563
        %v596 = vunpack.c.l.b16 %v564
        %v597 = vunpack.c.l.b16 %v565
        %v598 = vunpack.c.l.b16 %v566
        %v599 = vunpack.c.l.b16 %v567
        %v600 = vunpack.c.l.b16 %v568
        %v601 = vunpack.c.l.b16 %v569
        %v602 = vunpack.c.l.b16 %v570
        %v603 = vunpack.c.l.b16 %v571
        %v604 = vunpack.c.l.b16 %v572
        %v605 = vunpack.c.l.b16 %v573
        %v606 = vunpack.c.l.b16 %v574
        %v607 = vunpack.c.l.b16 %v575
        %v608 = vunpack.c.l.b16 %v576
        %v609 = vpack.c.b16 %v594, %v593
        %v610 = vpack.c.b16 %v596, %v595
        %v611 = vpack.c.b16 %v598, %v597
        %v612 = vpack.c.b16 %v600, %v599
        %v613 = vpack.c.b16 %v602, %v601
        %v614 = vpack.c.b16 %v604, %v603
        %v615 = vpack.c.b16 %v606, %v605
        %v616 = vpack.c.b16 %v608, %v607
        %625 = vmatprep.subr.bf16.mxu0 0
        %626 = vmatpush1.bf16.msra.mxu0 %v609
        %627 = vmatprep.subr.bf16.mxu0 0
        %628 = vmatpush1.bf16.msra.mxu0 %v610
        %629 = vmatprep.subr.bf16.mxu0 0
        %630 = vmatpush1.bf16.msra.mxu0 %v611
        %631 = vmatprep.subr.bf16.mxu0 0
        %632 = vmatpush1.bf16.msra.mxu0 %v612
        %633 = vmatprep.subr.bf16.mxu0 0
        %634 = vmatpush1.bf16.msra.mxu0 %v613
        %635 = vmatprep.subr.bf16.mxu0 0
        %636 = vmatpush1.bf16.msra.mxu0 %v614
        %637 = vmatprep.subr.bf16.mxu0 0
        %638 = vmatpush1.bf16.msra.mxu0 %v615
        %639 = vmatprep.subr.bf16.mxu0 0
        %640 = vmatpush1.bf16.msra.mxu0 %v616
        %641 = vmatprep.subr.bf16.mxu0 0
        %642 = vmatpush1.bf16.msra.mxu0 0
        %643 = vmatprep.subr.bf16.mxu0 0
        %644 = vmatpush1.bf16.msra.mxu0 0
        %645 = vmatprep.subr.bf16.mxu0 0
        %646 = vmatpush1.bf16.msra.mxu0 0
        %647 = vmatprep.subr.bf16.mxu0 0
        %648 = vmatpush1.bf16.msra.mxu0 0
        %649 = vmatprep.subr.bf16.mxu0 0
        %650 = vmatpush1.bf16.msra.mxu0 0
        %651 = vmatprep.subr.bf16.mxu0 0
        %652 = vmatpush1.bf16.msra.mxu0 0
        %653 = vmatprep.subr.bf16.mxu0 0
        %654 = vmatpush1.bf16.msra.mxu0 0
        %655 = vmatprep.subr.bf16.mxu0 0
        %656 = vmatpush1.bf16.msra.mxu0 0
        %657 = vmatprep.mubr.bf16.mxu0 0
        %658 = vmatmul.mubr.bf16.gmra.mrb[0].mxu0 %v452
        %v659 = vpop.f32.mrb[0].mxu0
        %v660 = vadd.f32 0.0, %v659
        %v661 = vpop.f32.mrb[0].mxu0
        %v662 = vpop.f32.mrb[0].mxu0
        %v663 = vpop.f32.mrb[0].mxu0
        %664 = vdwg.mxu0
        %v665 = vadd.f32 %v560, %v660
        %666 = vst [vmem:[#allocation2] sm:$0xff] %v665
        %p667 = scmp.eq.s32.totalorder %s34, 2
        // Predicated region
        $region65: #{tpu_custom_call.1} parent=43 // pred_check
          %p668 = pneg %p667
        $region66: #{tpu_custom_call.1} parent=43 // pred_check_branch
          %670 = sbr.rel (%p668) target = $region68
        $region67: #{tpu_custom_call.1} parent=43 // pred_region
          %v671 = vld [vmem:[%s424] sm:$0xff]
          %v672 = vld [vmem:[%s433] sm:$0xff]
          %v673 = vld [vmem:[#allocation2] sm:$0xff]
          %v674 = vmul.f32 %v672, %v673
          %v675 = vadd.f32 %v671, %v674
          %676 = vst [vmem:[%s424] sm:$0xff] %v675
        $region68: #{tpu_custom_call.1} parent=43 // pred_fallthru
          _
        %s677 = sand.u32 %s209, 1
        %s678 = scalar_lea.sflag [#allocation5], %s677
        %s679 = sand.u32 %s209, 1
        %s680 = smul.addr %s679, 8
        %s681 = scalar_lea.vmem [#allocation11], %s680
        // Predicated region
        $region69: #{tpu_custom_call.1} parent=43 // pred_check
          %p682 = pneg %p219
        $region70: #{tpu_custom_call.1} parent=43 // pred_check_branch
          %684 = sbr.rel (%p682) target = $region72
        $region71: #{tpu_custom_call.1} parent=43 // pred_region
          %s686 = ssub.s32 128, 128
          %687 = vsyncadd %s678, %s686
          %s688 = smul.addr %s33, 128
          %s689 = scalar_lea.hbm %s6, %s688
          %s691 = sshll.u32 %s681, 4
          %s692 = int_to_ptr.vmem [resolvable:$true] %s691
          %694 = dma.vmem_to_hbm [thread:$0]  %s692, 128, %s689, %s678
        $region72: #{tpu_custom_call.1} parent=43 // pred_fallthru
          _
      $region44: #{tpu_custom_call.1} parent=5 // pred_fallthru
        _
      %p695 = scmp.le.s32.totalorder 2, %s24
      // Predicated region
      $region73: #{tpu_custom_call.1} parent=5 // pred_check
        %p696 = pneg %p695
      $region74: #{tpu_custom_call.1} parent=5 // pred_check_branch
        %698 = sbr.rel (%p696) target = $region76
      $region75: #{tpu_custom_call.1} parent=5 // pred_region
        %s699 = ssub.s32 %s24, 2
        // Predicated region
        $region77: #{tpu_custom_call.1} parent=75 // pred_check
          %p700 = pneg %p225
        $region78: #{tpu_custom_call.1} parent=75 // pred_check_branch
          %702 = sbr.rel (%p700) target = $region80
        $region79: #{tpu_custom_call.1} parent=75 // pred_region
          %s703 = sand.u32 %s210, 1
          %s704 = scalar_lea.sflag [#allocation5], %s703
          %s705 = sand.u32 %s210, 1
          %s706 = smul.addr %s705, 8
          %s707 = scalar_lea.vmem [#allocation11], %s706
          %708 = dma.done %s704, 128
        $region80: #{tpu_custom_call.1} parent=75 // pred_fallthru
          _
      $region76: #{tpu_custom_call.1} parent=5 // pred_fallthru
        _
    $region6: #{tpu_custom_call.1} parent=1 // loop_footer
      %s28 = sadd.s32 1, %s24
    $region7: #{tpu_custom_call.1} parent=1 // loop_footer_branch
      %23 = sbr.rel target = $region3
    $region8: #{tpu_custom_call.1} parent=1 // loop_exit
      _
    %709 = vsyncpa [#allocation4], 1
    %s710 = scalar_lea.sflag [#allocation4], 1
    %711 = vsyncpa %s710, 1
    %712 = vsyncpa [#allocation7], 1
    %s713 = scalar_lea.sflag [#allocation7], 1
    %714 = vsyncpa %s713, 1
    %715 = vsyncpa [#allocation10], 1
    %s716 = scalar_lea.sflag [#allocation10], 1
    %717 = vsyncpa %s716, 1
    %718 = vsyncpa [#allocation5], 1
    %s719 = scalar_lea.sflag [#allocation5], 1
    %720 = vsyncpa %s719, 1

</llo_original>
